<compile_context>
chip_gen: v7x
topology: tpu7x:2x2x1
jax: 0.10.0
libtpu: 0.0.40
codegen_flags: <defaults>
</compile_context>

<pallas_src>
import functools

import jax
import jax.numpy as jnp
import numpy as np
from jax import lax
from jax.experimental import pallas as pl
from jax.experimental.pallas import tpu as pltpu

EPS_OUTER = 1e-6            # matches torch.full_like(torch.ger(std, std), 1e-06)


def _vmem_budget_bytes():
    """~75% of this generation's VMEM (96 MiB on v5e/v6e, 48 MiB on v7x)."""
    cap = 128 * 1024 * 1024
    try:
        info = pltpu.get_tpu_info()
        cap = int(getattr(info, "vmem_capacity_bytes", cap))
    except Exception:
        pass
    return (cap * 3) // 4


def _pick_batch_tile(n, target):
    """Largest power-of-two (>=8) batch tile <= min(target, n).

    The grid is always cdiv(n, tile) with a masked / partially-written last
    block, so no divisibility is required and there is no full-batch fallback.
    """
    if n <= 8:
        return n                      # full-dim block (always legal)
    target = max(8, int(target))
    t = 8
    while t * 2 <= min(target, n):
        t *= 2
    return t


# --------------------------------------------------------------------------
# Shared whitening-scale math (runs fully inside VMEM, (1,H)/(H,H) operands).
# --------------------------------------------------------------------------
def _scale_from_cov_std(cov, std, *, eps, beta):
    hidden = cov.shape[0]
    eye = (lax.broadcasted_iota(jnp.int32, (hidden, hidden), 0)
           == lax.broadcasted_iota(jnp.int32, (hidden, hidden), 1))
    diag = jnp.sum(jnp.where(eye, cov, 0.0), axis=0, keepdims=True)       # (1,H)
    # outer[i,j] = std[i]*std[j]: rank-1 MXU product (no (H,1) input, no
    # in-kernel transpose).
    outer = lax.dot_general(std, std, (((0,), (0,)), ((), ())),
                            preferred_element_type=jnp.float32) + EPS_OUTER
    corr = jnp.clip(cov / outer, -1.0, 1.0)
    corr2 = corr * corr
    # gamma[j] = mean_i corr[i,j]^2 == reference's row mean because cov (and
    # hence corr) is symmetric for this module (zeros init + symmetric EMA
    # updates).  Reduce on the otherwise-idle MXU via a ones-row matmul.
    ones_row = jnp.full((1, hidden), 1.0 / float(hidden), dtype=jnp.float32)
    gamma = lax.dot_general(ones_row, corr2, (((1,), (0,)), ((), ())),
                            preferred_element_type=jnp.float32)           # (1,H)
    denorm = gamma * std
    if beta == 0.5:
        scale = lax.rsqrt(denorm + eps)          # single EUP op (free slot)
    else:
        scale = jnp.exp(-beta * jnp.log(denorm + eps))
    e_tot = jnp.sum(diag, axis=1, keepdims=True)                          # (1,1)
    new_e = jnp.sum(diag * scale * scale, axis=1, keepdims=True)
    m = jnp.sqrt(e_tot / (new_e + eps))
    return scale * m


# --------------------------------------------------------------------------
# Kernel 1 (training): batch moments + EMA fold + fused scale computation.
# --------------------------------------------------------------------------
def _iso_stats_kernel(x_ref, cov_ref, std_ref,
                      new_cov_ref, new_std_ref, scale_ref,
                      sum_x_ref, sum_xx_ref,
                      *, momentum, eps, beta, n_total, tile_n, ragged):
    k = pl.program_id(0)

    @pl.when(k == 0)
    def _init():
        sum_x_ref[...] = jnp.zeros_like(sum_x_ref)
        sum_xx_ref[...] = jnp.zeros_like(sum_xx_ref)

    x = x_ref[...]                               # NATIVE dtype (bf16 stays bf16)
    if ragged:
        # Mask padded rows of the (possibly partial) last block.
        rows = lax.broadcasted_iota(jnp.int32, x.shape, 0) + k * tile_n
        x = jnp.where(rows < n_total, x, jnp.zeros_like(x))

    # Batch sum on the VPU in f32.
    sum_x_ref[...] += jnp.sum(x.astype(jnp.float32), axis=0, keepdims=True)
    # x.T @ x on the MXU in the native dtype (bf16-native on v5e/v6e/v7x),
    # f32 accumulation.  No per-step x*x: E[x^2] = diag(sum_xx)/n at finalize.
    sum_xx_ref[...] += lax.dot_general(
        x, x, dimension_numbers=(((0,), (0,)), ((), ())),
        preferred_element_type=jnp.float32)

    @pl.when(k == pl.num_programs(0) - 1)
    def _finalize():
        hidden = sum_xx_ref.shape[0]
        inv_n = 1.0 / float(n_total)
        sum_xx = sum_xx_ref[...]
        mean = sum_x_ref[...] * inv_n                                     # (1,H)
        eye = (lax.broadcasted_iota(jnp.int32, (hidden, hidden), 0)
               == lax.broadcasted_iota(jnp.int32, (hidden, hidden), 1))
        ex2 = jnp.sum(jnp.where(eye, sum_xx, 0.0), axis=0, keepdims=True) * inv_n
        # Raw-moment variance (single pass over x); clamped at 0.
        var = jnp.maximum(ex2 - mean * mean, 0.0)
        batch_std = jnp.sqrt(var)
        mean_outer = lax.dot_general(mean, mean, (((0,), (0,)), ((), ())),
                                     preferred_element_type=jnp.float32)  # (H,H)
        batch_cov = sum_xx * inv_n - mean_outer
        new_cov = cov_ref[...] + momentum * (batch_cov - cov_ref[...])
        new_std = std_ref[...] + momentum * (batch_std - std_ref[...])
        new_cov_ref[...] = new_cov
        new_std_ref[...] = new_std
        # Fused scale: no second pallas_call, no H^2 HBM round trip of cov,
        # no wrapper-side diagonal gather in the training path.
        scale_ref[...] = _scale_from_cov_std(
            new_cov, new_std, eps=eps, beta=beta).astype(scale_ref.dtype)


# --------------------------------------------------------------------------
# Kernel 2 (eval only): isotropic scale from cov / std; diag(cov) in-kernel.
# --------------------------------------------------------------------------
def _iso_scale_kernel(cov_ref, std_ref, scale_ref, *, eps, beta):
    cov = cov_ref[...].astype(jnp.float32)
    std = std_ref[...].astype(jnp.float32)
    scale_ref[...] = _scale_from_cov_std(
        cov, std, eps=eps, beta=beta).astype(scale_ref.dtype)
    # TODO(synk): for H large enough that the (H,H) cov block plus the
    # outer/corr/corr2 temporaries exceed VMEM (~1.2k on v7x's 64 MiB), tile
    # over row blocks with gamma/diag accumulated in (1,H) scratch.


# --------------------------------------------------------------------------
# Kernel 3: out = input * scale, native dtype end-to-end (memory-bound).
# --------------------------------------------------------------------------
def _apply_scale_kernel(x_ref, scale_ref, o_ref):
    # scale is pre-cast to x.dtype in the wrapper -> bf16 multiply on v6e/v7x
    # (halves vreg/VALU pressure); f32 inputs are unchanged.
    o_ref[...] = x_ref[...] * scale_ref[...]


# --------------------------------------------------------------------------
# Wrapper
# --------------------------------------------------------------------------
def iso_bn_forward(x, cov, std, *, momentum=0.05, eps=0.001, beta=0.5,
                   training=True, stats_tile=None, apply_tile=None):
    """Functional IsoBN forward. Returns (output, new_cov, new_std)."""
    N, H = x.shape
    elem = jnp.dtype(x.dtype).itemsize
    cov = cov.astype(jnp.float32)
    std_r = std.reshape(1, H).astype(jnp.float32)

    budget = _vmem_budget_bytes()

    if training:
        # Single-buffer the resident (H,H) cov input once it is big enough to
        # matter for the VMEM budget; keep default pipelining for small H.
        single_buf = (H * H * 4) >= (4 << 20)
        cov_mode = pl.Buffered(1) if single_buf else None
        cov_bufs = 1 if single_buf else 2
        # Fixed VMEM: cov-in, new_cov-out (conservatively 2 bufs), sum_xx scratch.
        fixed = (cov_bufs + 2 + 1) * H * H * 4 + 16 * H * 4
        avail = max(budget - fixed, 2 * 8 * H * elem)
        if stats_tile is None:
            tn = _pick_batch_tile(N, min(1024, avail // (2 * H * elem)))
        else:
            tn = int(stats_tile)
        grid_n = pl.cdiv(N, tn)
        ragged = (N % tn) != 0

        kernel = functools.partial(
            _iso_stats_kernel, momentum=momentum, eps=eps, beta=beta,
            n_total=N, tile_n=tn, ragged=ragged)
        new_cov, new_std, scale = pl.pallas_call(
            kernel,
            grid=(grid_n,),
            in_specs=[pl.BlockSpec((tn, H), lambda k: (k, 0)),
                      pl.BlockSpec((H, H), lambda k: (0, 0),
                                   pipeline_mode=cov_mode),
                      pl.BlockSpec((1, H), lambda k: (0, 0))],
            out_specs=(pl.BlockSpec((H, H), lambda k: (0, 0)),
                       pl.BlockSpec((1, H), lambda k: (0, 0)),
                       pl.BlockSpec((1, H), lambda k: (0, 0))),
            out_shape=(jax.ShapeDtypeStruct((H, H), jnp.float32),
                       jax.ShapeDtypeStruct((1, H), jnp.float32),
                       jax.ShapeDtypeStruct((1, H), jnp.float32)),
            scratch_shapes=[pltpu.VMEM((1, H), jnp.float32),
                            pltpu.VMEM((H, H), jnp.float32)],
            compiler_params=pltpu.CompilerParams(
                dimension_semantics=("arbitrary",),
                vmem_limit_bytes=budget),
            cost_estimate=pl.CostEstimate(
                flops=2 * N * H * H + 6 * N * H + 16 * H * H,
                transcendentals=4 * H,
                bytes_accessed=N * H * elem + 2 * H * H * 4 + 4 * H * 4),
        )(x, cov, std_r)
        cov, std_r = new_cov, new_std
        # TODO(synk): on v7x, split the moment accumulation over the 2
        # TensorCores with a leading core-parallel grid axis producing per-core
        # partial (sum_x, sum_xx) and a tiny combine before the finalize.
    else:
        scale = pl.pallas_call(
            functools.partial(_iso_scale_kernel, eps=eps, beta=beta),
            grid=(1,),
            in_specs=[pl.BlockSpec((H, H), lambda i: (0, 0)),
                      pl.BlockSpec((1, H), lambda i: (0, 0))],
            out_specs=pl.BlockSpec((1, H), lambda i: (0, 0)),
            out_shape=jax.ShapeDtypeStruct((1, H), jnp.float32),
            compiler_params=pltpu.CompilerParams(vmem_limit_bytes=budget),
            cost_estimate=pl.CostEstimate(
                flops=12 * H * H, transcendentals=2 * H,
                bytes_accessed=H * H * 4 + 2 * H * 4),
        )(cov, std_r)

    # Memory-bound apply pass: biggest tile whose in+out double buffers fit
    # the budget (cap raised to 2048 rows to amortize per-step overhead on
    # fast-HBM chips), native dtype end-to-end.
    if apply_tile is None:
        apply_avail = max(budget - 16 * H * 4, 4 * 8 * H * elem)
        bn = _pick_batch_tile(N, min(2048, apply_avail // (4 * H * elem)))
    else:
        bn = int(apply_tile)
    scale_cast = scale.astype(x.dtype)
    out = pl.pallas_call(
        _apply_scale_kernel,
        grid=(pl.cdiv(N, bn),),
        in_specs=[pl.BlockSpec((bn, H), lambda i: (i, 0)),
                  pl.BlockSpec((1, H), lambda i: (0, 0))],
        out_specs=pl.BlockSpec((bn, H), lambda i: (i, 0)),
        out_shape=jax.ShapeDtypeStruct((N, H), x.dtype),
        compiler_params=pltpu.CompilerParams(
            dimension_semantics=("parallel",),
            vmem_limit_bytes=budget),
        cost_estimate=pl.CostEstimate(
            flops=N * H, transcendentals=0,
            bytes_accessed=2 * N * H * elem + H * elem),
    )(x, scale_cast)

    return out, cov, std_r.reshape(H)
    # TODO(synk): the torch module mutates nn.Parameter buffers in-place
    # (self.cov.data / self.std.data); here the updated stats are returned
    # functionally instead.


# --------------------------------------------------------------------------
# Pure numpy reference replicating the torch forward.
# --------------------------------------------------------------------------
def _reference(xn, cn, sn, momentum, eps, beta, training):
    if training:
        n = xn.shape[0]
        mean = xn.mean(0)
        y = xn - mean
        bstd = np.sqrt((y ** 2).mean(0))
        bcov = y.T @ y / n
        cn = cn + momentum * (bcov - cn)
        sn = sn + momentum * (bstd - sn)
    outer = np.outer(sn, sn) + 1e-6
    corr = np.clip(cn / outer, -1.0, 1.0)
    gamma = (corr ** 2).mean(1)
    denorm = gamma * sn
    scale = 1.0 / (denorm + eps) ** beta
    E = np.trace(cn)
    new_E = (np.diag(cn) * scale ** 2).sum()
    m = np.sqrt(E / (new_E + eps))
    scale = scale * m
    return xn * scale[None, :], cn, sn


def _check(N, H, training, stats_tile=None, apply_tile=None):
    key = jax.random.PRNGKey(0)
    k1, k2, k3 = jax.random.split(key, 3)
    x = jax.random.normal(k1, (N, H), dtype=jnp.float32)
    # Deterministic synthetic parameters (module inits them to zeros, which is
    # degenerate: output would be identically 0).  Symmetric PSD cov, positive
    # std so the whitening math is non-trivial.
    a = jax.random.normal(k2, (H, H), dtype=jnp.float32)
    cov0 = (a @ a.T) / H
    std0 = jnp.abs(jax.random.normal(k3, (H,), dtype=jnp.float32)) + 0.1

    out, new_cov, new_std = iso_bn_forward(
        x, cov0, std0, momentum=0.05, eps=0.001, beta=0.5, training=training,
        stats_tile=stats_tile, apply_tile=apply_tile)
    jax.block_until_ready(out)

    ref_out, ref_cov, ref_std = _reference(
        np.asarray(x), np.asarray(cov0), np.asarray(std0),
        momentum=0.05, eps=0.001, beta=0.5, training=training)

    assert np.allclose(np.asarray(out), ref_out, rtol=2e-3, atol=2e-3)
    assert np.allclose(np.asarray(new_cov), ref_cov, rtol=2e-3, atol=2e-3)
    assert np.allclose(np.asarray(new_std), ref_std, rtol=2e-3, atol=2e-3)


if __name__ == "__main__":
    _check(N=16, H=32, training=True)                    # single-step stats grid
    _check(N=24, H=32, training=True, stats_tile=8)      # multi-step accumulation
    _check(N=20, H=32, training=True, stats_tile=8,
           apply_tile=8)                                 # ragged N: masked last block
    _check(N=16, H=32, training=False)                   # eval path (scale kernel)
    print("KERNEL_OK")
</pallas_src>

<mosaic_0001>
module attributes {stable_mosaic.version = 11 : i64} {
  func.func @_iso_stats_kernel(%arg0: i32, %arg1: memref<16x32xf32, #tpu.memory_space<vmem>>, %arg2: memref<32x32xf32, #tpu.memory_space<vmem>>, %arg3: memref<1x32xf32, #tpu.memory_space<vmem>>, %arg4: memref<32x32xf32, #tpu.memory_space<vmem>>, %arg5: memref<1x32xf32, #tpu.memory_space<vmem>>, %arg6: memref<1x32xf32, #tpu.memory_space<vmem>>, %arg7: memref<1x32xf32, #tpu.memory_space<vmem>>, %arg8: memref<32x32xf32, #tpu.memory_space<vmem>>) attributes {dimension_semantics = [#tpu.dimension_semantics<arbitrary>], iteration_bounds = array<i64: 1>, scalar_prefetch = 0 : i64, scratch_operands = 2 : i64, tpu.core_type = #tpu.core_type<tc>, window_params = [{transform_indices = @transform_0, window_bounds = array<i64: 16, 32>}, {pipeline_mode = #tpu.pipeline_mode<synchronous>, transform_indices = @transform_1, window_bounds = array<i64: 32, 32>}, {pipeline_mode = #tpu.pipeline_mode<synchronous>, transform_indices = @transform_2, window_bounds = array<i64: 1, 32>}, {pipeline_mode = #tpu.pipeline_mode<synchronous>, transform_indices = @transform_3, window_bounds = array<i64: 32, 32>}, {pipeline_mode = #tpu.pipeline_mode<synchronous>, transform_indices = @transform_4, window_bounds = array<i64: 1, 32>}, {pipeline_mode = #tpu.pipeline_mode<synchronous>, transform_indices = @transform_5, window_bounds = array<i64: 1, 32>}]} {
    %c0_i32 = arith.constant 0 : i32
    %0 = arith.cmpi eq, %arg0, %c0_i32 : i32
    %1 = arith.extui %0 : i1 to i32
    %c0_i32_0 = arith.constant 0 : i32
    %2 = arith.cmpi ne, %1, %c0_i32_0 : i32
    scf.if %2 {
      %cst_13 = arith.constant 0.000000e+00 : f32
      %16 = vector.broadcast %cst_13 : f32 to vector<1x32xf32>
      %c0_14 = arith.constant 0 : index
      %c0_15 = arith.constant 0 : index
      %17 = vector.load %arg7[%c0_14, %c0_15] : memref<1x32xf32, #tpu.memory_space<vmem>>, vector<1x32xf32>
      tpu.vector_store %arg7[%c0_14, %c0_15], %16 {strides = array<i32>} : memref<1x32xf32, #tpu.memory_space<vmem>>, vector<1x32xf32>,
      %cst_16 = arith.constant 0.000000e+00 : f32
      %18 = vector.broadcast %cst_16 : f32 to vector<32x32xf32>
      %c0_17 = arith.constant 0 : index
      %c0_18 = arith.constant 0 : index
      %19 = vector.load %arg8[%c0_17, %c0_18] : memref<32x32xf32, #tpu.memory_space<vmem>>, vector<32x32xf32>
      tpu.vector_store %arg8[%c0_17, %c0_18], %18 {strides = array<i32>} : memref<32x32xf32, #tpu.memory_space<vmem>>, vector<32x32xf32>,
    } else {
    }
    %c0 = arith.constant 0 : index
    %c0_1 = arith.constant 0 : index
    %3 = vector.load %arg1[%c0, %c0_1] : memref<16x32xf32, #tpu.memory_space<vmem>>, vector<16x32xf32>
    %c0_2 = arith.constant 0 : index
    %c0_3 = arith.constant 0 : index
    %4 = vector.load %arg7[%c0_2, %c0_3] : memref<1x32xf32, #tpu.memory_space<vmem>>, vector<1x32xf32>
    %cst = arith.constant dense<0.000000e+00> : vector<32xf32>
    %5 = vector.multi_reduction <add>, %3, %cst [0] : vector<16x32xf32> to vector<32xf32>
    %6 = vector.shape_cast %5 : vector<32xf32> to vector<1x32xf32>
    %7 = arith.addf %4, %6 : vector<1x32xf32>
    %c0_4 = arith.constant 0 : index
    %c0_5 = arith.constant 0 : index
    %8 = vector.load %arg7[%c0_4, %c0_5] : memref<1x32xf32, #tpu.memory_space<vmem>>, vector<1x32xf32>
    tpu.vector_store %arg7[%c0_4, %c0_5], %7 {strides = array<i32>} : memref<1x32xf32, #tpu.memory_space<vmem>>, vector<1x32xf32>,
    %c0_6 = arith.constant 0 : index
    %c0_7 = arith.constant 0 : index
    %9 = vector.load %arg8[%c0_6, %c0_7] : memref<32x32xf32, #tpu.memory_space<vmem>>, vector<32x32xf32>
    %cst_8 = arith.constant dense<0.000000e+00> : vector<32x32xf32>
    %10 = tpu.matmul %3, %3, %cst_8 {dimension_numbers = #tpu.dot_dimension_numbers<[0], [0], [1], [1], [0, 1, 1, 1], [], []>} : vector<16x32xf32>, vector<16x32xf32>, vector<32x32xf32> -> vector<32x32xf32>
    %11 = arith.addf %9, %10 : vector<32x32xf32>
    %c0_9 = arith.constant 0 : index
    %c0_10 = arith.constant 0 : index
    %12 = vector.load %arg8[%c0_9, %c0_10] : memref<32x32xf32, #tpu.memory_space<vmem>>, vector<32x32xf32>
    tpu.vector_store %arg8[%c0_9, %c0_10], %11 {strides = array<i32>} : memref<32x32xf32, #tpu.memory_space<vmem>>, vector<32x32xf32>,
    %c0_i32_11 = arith.constant 0 : i32
    %13 = arith.cmpi eq, %arg0, %c0_i32_11 : i32
    %14 = arith.extui %13 : i1 to i32
    %c0_i32_12 = arith.constant 0 : i32
    %15 = arith.cmpi ne, %14, %c0_i32_12 : i32
    scf.if %15 {
      %c0_13 = arith.constant 0 : index
      %c0_14 = arith.constant 0 : index
      %16 = vector.load %arg8[%c0_13, %c0_14] : memref<32x32xf32, #tpu.memory_space<vmem>>, vector<32x32xf32>
      %c0_15 = arith.constant 0 : index
      %c0_16 = arith.constant 0 : index
      %17 = vector.load %arg7[%c0_15, %c0_16] : memref<1x32xf32, #tpu.memory_space<vmem>>, vector<1x32xf32>
      %cst_17 = arith.constant 6.250000e-02 : f32
      %18 = vector.broadcast %cst_17 : f32 to vector<1x32xf32>
      %19 = arith.mulf %17, %18 : vector<1x32xf32>
      %20 = tpu.iota {dimensions = array<i32: 0>} : vector<32x32xi32>
      %21 = tpu.iota {dimensions = array<i32: 1>} : vector<32x32xi32>
      %22 = arith.cmpi eq, %20, %21 : vector<32x32xi32>
      %cst_18 = arith.constant 0.000000e+00 : f32
      %23 = vector.broadcast %cst_18 : f32 to vector<32x32xf32>
      %24 = arith.select %22, %16, %23 : vector<32x32xi1>, vector<32x32xf32>
      %cst_19 = arith.constant dense<0.000000e+00> : vector<32xf32>
      %25 = vector.multi_reduction <add>, %24, %cst_19 [0] : vector<32x32xf32> to vector<32xf32>
      %26 = vector.shape_cast %25 : vector<32xf32> to vector<1x32xf32>
      %cst_20 = arith.constant 6.250000e-02 : f32
      %27 = vector.broadcast %cst_20 : f32 to vector<1x32xf32>
      %28 = arith.mulf %26, %27 : vector<1x32xf32>
      %29 = arith.mulf %19, %19 : vector<1x32xf32>
      %30 = arith.subf %28, %29 : vector<1x32xf32>
      %cst_21 = arith.constant 0.000000e+00 : f32
      %31 = vector.broadcast %cst_21 : f32 to vector<1x32xf32>
      %32 = arith.maximumf %30, %31 : vector<1x32xf32>
      %33 = math.sqrt %32 : vector<1x32xf32>
      %cst_22 = arith.constant dense<0.000000e+00> : vector<32x32xf32>
      %34 = tpu.matmul %19, %19, %cst_22 {dimension_numbers = #tpu.dot_dimension_numbers<[0], [0], [1], [1], [0, 1, 1, 1], [], []>} : vector<1x32xf32>, vector<1x32xf32>, vector<32x32xf32> -> vector<32x32xf32>
      %cst_23 = arith.constant 6.250000e-02 : f32
      %35 = vector.broadcast %cst_23 : f32 to vector<32x32xf32>
      %36 = arith.mulf %16, %35 : vector<32x32xf32>
      %37 = arith.subf %36, %34 : vector<32x32xf32>
      %c0_24 = arith.constant 0 : index
      %c0_25 = arith.constant 0 : index
      %38 = vector.load %arg2[%c0_24, %c0_25] : memref<32x32xf32, #tpu.memory_space<vmem>>, vector<32x32xf32>
      %c0_26 = arith.constant 0 : index
      %c0_27 = arith.constant 0 : index
      %39 = vector.load %arg2[%c0_26, %c0_27] : memref<32x32xf32, #tpu.memory_space<vmem>>, vector<32x32xf32>
      %40 = arith.subf %37, %39 : vector<32x32xf32>
      %cst_28 = arith.constant 5.000000e-02 : f32
      %41 = vector.broadcast %cst_28 : f32 to vector<32x32xf32>
      %42 = arith.mulf %41, %40 : vector<32x32xf32>
      %43 = arith.addf %38, %42 : vector<32x32xf32>
      %c0_29 = arith.constant 0 : index
      %c0_30 = arith.constant 0 : index
      %44 = vector.load %arg3[%c0_29, %c0_30] : memref<1x32xf32, #tpu.memory_space<vmem>>, vector<1x32xf32>
      %c0_31 = arith.constant 0 : index
      %c0_32 = arith.constant 0 : index
      %45 = vector.load %arg3[%c0_31, %c0_32] : memref<1x32xf32, #tpu.memory_space<vmem>>, vector<1x32xf32>
      %46 = arith.subf %33, %45 : vector<1x32xf32>
      %cst_33 = arith.constant 5.000000e-02 : f32
      %47 = vector.broadcast %cst_33 : f32 to vector<1x32xf32>
      %48 = arith.mulf %47, %46 : vector<1x32xf32>
      %49 = arith.addf %44, %48 : vector<1x32xf32>
      %c0_34 = arith.constant 0 : index
      %c0_35 = arith.constant 0 : index
      %50 = vector.load %arg4[%c0_34, %c0_35] : memref<32x32xf32, #tpu.memory_space<vmem>>, vector<32x32xf32>
      tpu.vector_store %arg4[%c0_34, %c0_35], %43 {strides = array<i32>} : memref<32x32xf32, #tpu.memory_space<vmem>>, vector<32x32xf32>,
      %c0_36 = arith.constant 0 : index
      %c0_37 = arith.constant 0 : index
      %51 = vector.load %arg5[%c0_36, %c0_37] : memref<1x32xf32, #tpu.memory_space<vmem>>, vector<1x32xf32>
      tpu.vector_store %arg5[%c0_36, %c0_37], %49 {strides = array<i32>} : memref<1x32xf32, #tpu.memory_space<vmem>>, vector<1x32xf32>,
      %52 = tpu.iota {dimensions = array<i32: 0>} : vector<32x32xi32>
      %53 = tpu.iota {dimensions = array<i32: 1>} : vector<32x32xi32>
      %54 = arith.cmpi eq, %52, %53 : vector<32x32xi32>
      %cst_38 = arith.constant 0.000000e+00 : f32
      %55 = vector.broadcast %cst_38 : f32 to vector<32x32xf32>
      %56 = arith.select %54, %43, %55 : vector<32x32xi1>, vector<32x32xf32>
      %cst_39 = arith.constant dense<0.000000e+00> : vector<32xf32>
      %57 = vector.multi_reduction <add>, %56, %cst_39 [0] : vector<32x32xf32> to vector<32xf32>
      %58 = vector.shape_cast %57 : vector<32xf32> to vector<1x32xf32>
      %cst_40 = arith.constant dense<0.000000e+00> : vector<32x32xf32>
      %59 = tpu.matmul %49, %49, %cst_40 {dimension_numbers = #tpu.dot_dimension_numbers<[0], [0], [1], [1], [0, 1, 1, 1], [], []>} : vector<1x32xf32>, vector<1x32xf32>, vector<32x32xf32> -> vector<32x32xf32>
      %cst_41 = arith.constant 9.99999997E-7 : f32
      %60 = vector.broadcast %cst_41 : f32 to vector<32x32xf32>
      %61 = arith.addf %59, %60 : vector<32x32xf32>
      %62 = arith.divf %43, %61 : vector<32x32xf32>
      %cst_42 = arith.constant -1.000000e+00 : f32
      %cst_43 = arith.constant 1.000000e+00 : f32
      %63 = vector.broadcast %cst_42 : f32 to vector<32x32xf32>
      %64 = arith.maximumf %63, %62 : vector<32x32xf32>
      %65 = vector.broadcast %cst_43 : f32 to vector<32x32xf32>
      %66 = arith.minimumf %65, %64 : vector<32x32xf32>
      %67 = arith.mulf %66, %66 : vector<32x32xf32>
      %cst_44 = arith.constant 3.125000e-02 : f32
      %68 = vector.broadcast %cst_44 : f32 to vector<1x32xf32>
      %cst_45 = arith.constant dense<0.000000e+00> : vector<1x32xf32>
      %69 = tpu.matmul %68, %67, %cst_45 {dimension_numbers = #tpu.dot_dimension_numbers<[1], [0], [0], [1], [0, 0, 1, 1], [], []>} : vector<1x32xf32>, vector<32x32xf32>, vector<1x32xf32> -> vector<1x32xf32>
      %70 = arith.mulf %69, %49 : vector<1x32xf32>
      %cst_46 = arith.constant 1.000000e-03 : f32
      %71 = vector.broadcast %cst_46 : f32 to vector<1x32xf32>
      %72 = arith.addf %70, %71 : vector<1x32xf32>
      %73 = math.rsqrt %72 : vector<1x32xf32>
      %cst_47 = arith.constant dense<0.000000e+00> : vector<1xf32>
      %74 = vector.multi_reduction <add>, %58, %cst_47 [1] : vector<1x32xf32> to vector<1xf32>
      %75 = vector.shape_cast %74 : vector<1xf32> to vector<1x1xf32>
      %76 = arith.mulf %58, %73 : vector<1x32xf32>
      %77 = arith.mulf %76, %73 : vector<1x32xf32>
      %cst_48 = arith.constant dense<0.000000e+00> : vector<1xf32>
      %78 = vector.multi_reduction <add>, %77, %cst_48 [1] : vector<1x32xf32> to vector<1xf32>
      %79 = vector.shape_cast %78 : vector<1xf32> to vector<1x1xf32>
      %cst_49 = arith.constant 1.000000e-03 : f32
      %80 = vector.broadcast %cst_49 : f32 to vector<1x1xf32>
      %81 = arith.addf %79, %80 : vector<1x1xf32>
      %82 = arith.divf %75, %81 : vector<1x1xf32>
      %83 = math.sqrt %82 : vector<1x1xf32>
      %84 = vector.broadcast %83 : vector<1x1xf32> to vector<1x32xf32>
      %85 = arith.mulf %73, %84 : vector<1x32xf32>
      %c0_50 = arith.constant 0 : index
      %c0_51 = arith.constant 0 : index
      %86 = vector.load %arg6[%c0_50, %c0_51] : memref<1x32xf32, #tpu.memory_space<vmem>>, vector<1x32xf32>
      tpu.vector_store %arg6[%c0_50, %c0_51], %85 {strides = array<i32>} : memref<1x32xf32, #tpu.memory_space<vmem>>, vector<1x32xf32>,
    } else {
    }
    return
  }
  func.func @transform_0(%arg0: i32) -> (i32, i32) {
    %c0_i32 = arith.constant 0 : i32
    %c0_i32_0 = arith.constant 0 : i32
    return %arg0, %c0_i32 : i32, i32
  }
  func.func @transform_1(%arg0: i32) -> (i32, i32) {
    %c0_i32 = arith.constant 0 : i32
    %c0_i32_0 = arith.constant 0 : i32
    %c0_i32_1 = arith.constant 0 : i32
    return %c0_i32, %c0_i32_0 : i32, i32
  }
  func.func @transform_2(%arg0: i32) -> (i32, i32) {
    %c0_i32 = arith.constant 0 : i32
    %c0_i32_0 = arith.constant 0 : i32
    %c0_i32_1 = arith.constant 0 : i32
    return %c0_i32, %c0_i32_0 : i32, i32
  }
  func.func @transform_3(%arg0: i32) -> (i32, i32) {
    %c0_i32 = arith.constant 0 : i32
    %c0_i32_0 = arith.constant 0 : i32
    %c0_i32_1 = arith.constant 0 : i32
    return %c0_i32, %c0_i32_0 : i32, i32
  }
  func.func @transform_4(%arg0: i32) -> (i32, i32) {
    %c0_i32 = arith.constant 0 : i32
    %c0_i32_0 = arith.constant 0 : i32
    %c0_i32_1 = arith.constant 0 : i32
    return %c0_i32, %c0_i32_0 : i32, i32
  }
  func.func @transform_5(%arg0: i32) -> (i32, i32) {
    %c0_i32 = arith.constant 0 : i32
    %c0_i32_0 = arith.constant 0 : i32
    %c0_i32_1 = arith.constant 0 : i32
    return %c0_i32, %c0_i32_0 : i32, i32
  }
}

</mosaic_0001>

<llo_original>
// kernel: tpu_custom_call.1
$region0: #{tpu_custom_call.1}
  #allocation0 [shape = 'u32[]', space=smem, size = 0x4, offset = 0x4, fixed_abs, tag = 'smem constant byte address 0x4 - core index']
  #allocation1 [shape = 'u32[144,128]{1,0:T(1,128)}', space=vmem, size = 0x12000, scoped, tag = 'internal scratch']
  #allocation2 [shape = 'f32[1,32]{1,0:T(1,128)}', space=vmem, size = 0x200, scoped, tag = 'scratch operand']
  #allocation3 [shape = 'f32[32,32]{1,0:T(8,128)}', space=vmem, size = 0x4000, scoped, tag = 'scratch operand']
  %s0 = inlined_call_operand.hbm [shape: f32[16,32], index: 0, kind: input, shape index: {}]
  %s1 = inlined_call_operand.hbm [shape: f32[32,32], index: 1, kind: input, shape index: {}]
  %s2 = inlined_call_operand.hbm [shape: f32[1,32], index: 2, kind: input, shape index: {}]
  %s3 = inlined_call_operand.hbm [shape: f32[32,32], index: 3, kind: output, shape index: {0}]
  %s4 = inlined_call_operand.hbm [shape: f32[1,32], index: 4, kind: output, shape index: {1}]
  %s5 = inlined_call_operand.hbm [shape: f32[1,32], index: 5, kind: output, shape index: {2}]
  %6 = xla_tuple %s3, %s4, %s5
  %s7 = sld [smem:[#allocation0]]
  $region58: #{tpu_custom_call.1} parent=0
    _
  %s9 = ssub.s32 1, %s7
  %s10 = scalar_select 0, %s9, %s7
  $region1: #{tpu_custom_call.1} parent=0
    #allocation4 [shape = 'u8[8192]{0}', space=vmem, size = 0x2000, scoped, tag = 'input window, operand 0, single buffered']
    #allocation5 [shape = 's32[1]{0}', space=sflag, size = 0x4, scoped, tag = 'scoped memory for tpu_custom_call.1']
    #allocation6 [shape = 's32[1]{0}', space=sflag, size = 0x4, scoped, tag = 'scoped memory for tpu_custom_call.1']
    #allocation7 [shape = 'u8[16384]{0}', space=vmem, size = 0x4000, scoped, tag = 'input window, operand 1, single buffered']
    #allocation8 [shape = 's32[1]{0}', space=sflag, size = 0x4, scoped, tag = 'scoped memory for tpu_custom_call.1']
    #allocation9 [shape = 'u8[512]{0}', space=vmem, size = 0x400, scoped, tag = 'input window, operand 2, single buffered']
    #allocation10 [shape = 'u8[16384]{0}', space=vmem, size = 0x4000, scoped, tag = 'output window, operand 0, single buffered']
    #allocation11 [shape = 'u8[512]{0}', space=vmem, size = 0x400, scoped, tag = 'output window, operand 1, single buffered']
    #allocation12 [shape = 's32[1]{0}', space=sflag, size = 0x4, scoped, tag = 'scoped memory for tpu_custom_call.1']
    #allocation13 [shape = 'u8[512]{0}', space=vmem, size = 0x400, scoped, tag = 'output window, operand 2, single buffered']
    %11 = vsyncpa [#allocation5], 0
    %12 = vsyncpa [#allocation8], 0
    %13 = vsyncpa [#allocation6], 0
    %14 = vsyncpa [#allocation12], 0
    // Predicated region
    $region2: #{tpu_custom_call.1} parent=1 // pred_check
      _
    $region3: #{tpu_custom_call.1} parent=1 // pred_check_branch
      %16 = sbr.rel (0) target = $region5
    $region4: #{tpu_custom_call.1} parent=1 // pred_region
      %s18 = ssub.s32 256, 256
      %19 = vsyncadd [#allocation5], %s18
      %s20 = sshll.u32 [#allocation4], 4
      %s21 = int_to_ptr.vmem [resolvable:$true] %s20
      %26 = dma.hbm_to_vmem [thread:$0]  %s0, 256, %s21, [#allocation5], 128, 128, 8
    $region5: #{tpu_custom_call.1} parent=1 // pred_fallthru
      _
    // Predicated region
    $region6: #{tpu_custom_call.1} parent=1 // pred_check
      _
    $region7: #{tpu_custom_call.1} parent=1 // pred_check_branch
      %28 = sbr.rel (0) target = $region9
    $region8: #{tpu_custom_call.1} parent=1 // pred_region
      %s30 = ssub.s32 512, 512
      %31 = vsyncadd [#allocation8], %s30
      %s32 = sshll.u32 [#allocation7], 4
      %s33 = int_to_ptr.vmem [resolvable:$true] %s32
      %38 = dma.hbm_to_vmem [thread:$0]  %s1, 512, %s33, [#allocation8], 128, 128, 8
    $region9: #{tpu_custom_call.1} parent=1 // pred_fallthru
      _
    // Predicated region
    $region10: #{tpu_custom_call.1} parent=1 // pred_check
      _
    $region11: #{tpu_custom_call.1} parent=1 // pred_check_branch
      %40 = sbr.rel (0) target = $region13
    $region12: #{tpu_custom_call.1} parent=1 // pred_region
      %s42 = ssub.s32 16, 16
      %43 = vsyncadd [#allocation8], %s42
      %s45 = sshll.u32 [#allocation9], 4
      %s46 = int_to_ptr.vmem [resolvable:$true] %s45
      %48 = dma.hbm_to_vmem [thread:$0]  %s2, 16, %s46, [#allocation8]
    $region13: #{tpu_custom_call.1} parent=1 // pred_fallthru
      _
    // Predicated region
    $region14: #{tpu_custom_call.1} parent=1 // pred_check
      _
    $region15: #{tpu_custom_call.1} parent=1 // pred_check_branch
      %50 = sbr.rel (0) target = $region17
    $region16: #{tpu_custom_call.1} parent=1 // pred_region
      %51 = dma.done [#allocation5], 256
    $region17: #{tpu_custom_call.1} parent=1 // pred_fallthru
      _
    // Predicated region
    $region18: #{tpu_custom_call.1} parent=1 // pred_check
      _
    $region19: #{tpu_custom_call.1} parent=1 // pred_check_branch
      %53 = sbr.rel (0) target = $region21
    $region20: #{tpu_custom_call.1} parent=1 // pred_region
      %54 = dma.done [#allocation8], 512
    $region21: #{tpu_custom_call.1} parent=1 // pred_fallthru
      _
    // Predicated region
    $region22: #{tpu_custom_call.1} parent=1 // pred_check
      _
    $region23: #{tpu_custom_call.1} parent=1 // pred_check_branch
      %56 = sbr.rel (0) target = $region25
    $region24: #{tpu_custom_call.1} parent=1 // pred_region
      %57 = dma.done [#allocation8], 16
    $region25: #{tpu_custom_call.1} parent=1 // pred_fallthru
      _
    %p58 = scmp.eq.s32.totalorder 0, 0
    // Predicated region
    $region26: #{tpu_custom_call.1} parent=1 // pred_check
      %p59 = pneg %p58
    $region27: #{tpu_custom_call.1} parent=1 // pred_check_branch
      %61 = sbr.rel (%p59) target = $region29
    $region28: #{tpu_custom_call.1} parent=1 // pred_region
      %vm62 = vcmask 253952
      %63 = vst.msk [vmem:[#allocation2] sm:$0x1] %vm62, 0.0
      %vm64 = vcmask 261120
      %65 = vst.msk [vmem:[#allocation3] sm:$0xff] %vm64, 0.0
      %66 = vst.msk [vmem:[#allocation3 + $0x8] sm:$0xff] %vm64, 0.0
      %67 = vst.msk [vmem:[#allocation3 + $0x10] sm:$0xff] %vm64, 0.0
      %68 = vst.msk [vmem:[#allocation3 + $0x18] sm:$0xff] %vm64, 0.0
    $region29: #{tpu_custom_call.1} parent=1 // pred_fallthru
      _
    %v69 = vld [vmem:[#allocation4] sm:$0xff]
    %v70 = vld [vmem:[#allocation4 + $0x8] sm:$0xff]
    %v71 = vld [vmem:[#allocation2] sm:$0x1]
    %vm72 = vcmask 261120
    %v73 = vsel %vm72, %v69, 0.0
    %v74 = vsel %vm72, %v70, 0.0
    %v75 = vadd.f32 %v73, %v74
    %v76 = vrot.slane %v75, 4
    %v77 = vadd.f32 %v75, %v76
    %v78 = vrot.slane %v77, 2
    %v79 = vadd.f32 %v77, %v78
    %v80 = vrot.slane %v79, 1
    %v81 = vadd.f32 %v79, %v80
    %v82 = vadd.f32 %v71, %v81
    %vm83 = vcmask 253952
    %84 = vst.msk [vmem:[#allocation2] sm:$0x1] %vm83, %v82
    %v85 = vld [vmem:[#allocation3] sm:$0xff]
    %v86 = vld [vmem:[#allocation3 + $0x8] sm:$0xff]
    %v87 = vld [vmem:[#allocation3 + $0x10] sm:$0xff]
    %v88 = vld [vmem:[#allocation3 + $0x18] sm:$0xff]
    %89 = vxpose.xlu0.b32.start [1/16] %v69, 128
    %90 = vxpose.xlu0.b32.cont [2/16] %v70, 128
    %91 = vxpose.xlu0.b32.cont [3/16] 0.0, 128
    %92 = vxpose.xlu0.b32.cont [4/16] 0.0, 128
    %93 = vxpose.xlu0.b32.cont [5/16] 0.0, 128
    %94 = vxpose.xlu0.b32.cont [6/16] 0.0, 128
    %95 = vxpose.xlu0.b32.cont [7/16] 0.0, 128
    %96 = vxpose.xlu0.b32.cont [8/16] 0.0, 128
    %97 = vxpose.xlu0.b32.cont [9/16] 0.0, 128
    %98 = vxpose.xlu0.b32.cont [10/16] 0.0, 128
    %99 = vxpose.xlu0.b32.cont [11/16] 0.0, 128
    %100 = vxpose.xlu0.b32.cont [12/16] 0.0, 128
    %101 = vxpose.xlu0.b32.cont [13/16] 0.0, 128
    %102 = vxpose.xlu0.b32.cont [14/16] 0.0, 128
    %103 = vxpose.xlu0.b32.cont [15/16] 0.0, 128
    %104 = vxpose.xlu0.b32.end [16/16] 0.0, 128
    %v105 = vpop.trf.xlu0
    %v106 = vpop.trf.xlu0
    %v107 = vpop.trf.xlu0
    %v108 = vpop.trf.xlu0
    %v109 = vpop.trf.xlu0
    %v110 = vpop.trf.xlu0
    %v111 = vpop.trf.xlu0
    %v112 = vpop.trf.xlu0
    %v113 = vpop.trf.xlu0
    %v114 = vpop.trf.xlu0
    %v115 = vpop.trf.xlu0
    %v116 = vpop.trf.xlu0
    %v117 = vpop.trf.xlu0
    %v118 = vpop.trf.xlu0
    %v119 = vpop.trf.xlu0
    %v120 = vpop.trf.xlu0
    %vm121 = vcmask 130048
    %v123 = vsel %vm121, %v105, 0
    %v126 = vsel %vm121, %v106, 0
    %v129 = vsel %vm121, %v107, 0
    %v132 = vsel %vm121, %v108, 0
    %134 = vmatprep.subr.mxu0 0.0
    %135 = vmatpush1.msra.mxu0 %v69
    %136 = vmatprep.subr.mxu0 0.0
    %137 = vmatpush1.msra.mxu0 %v70
    %138 = vmatprep.subr.mxu0 0.0
    %139 = vmatpush1.msra.mxu0 0.0
    %140 = vmatprep.subr.mxu0 0.0
    %141 = vmatpush1.msra.mxu0 0.0
    %142 = vmatprep.subr.mxu0 0.0
    %143 = vmatpush1.msra.mxu0 0.0
    %144 = vmatprep.subr.mxu0 0.0
    %145 = vmatpush1.msra.mxu0 0.0
    %146 = vmatprep.subr.mxu0 0.0
    %147 = vmatpush1.msra.mxu0 0.0
    %148 = vmatprep.subr.mxu0 0.0
    %149 = vmatpush1.msra.mxu0 0.0
    %150 = vmatprep.subr.mxu0 0.0
    %151 = vmatpush1.msra.mxu0 0.0
    %152 = vmatprep.subr.mxu0 0.0
    %153 = vmatpush1.msra.mxu0 0.0
    %154 = vmatprep.subr.mxu0 0.0
    %155 = vmatpush1.msra.mxu0 0.0
    %156 = vmatprep.subr.mxu0 0.0
    %157 = vmatpush1.msra.mxu0 0.0
    %158 = vmatprep.subr.mxu0 0.0
    %159 = vmatpush1.msra.mxu0 0.0
    %160 = vmatprep.subr.mxu0 0.0
    %161 = vmatpush1.msra.mxu0 0.0
    %162 = vmatprep.subr.mxu0 0.0
    %163 = vmatpush1.msra.mxu0 0.0
    %164 = vmatprep.subr.mxu0 0.0
    %165 = vmatpush1.msra.mxu0 0.0
    %166 = vmatprep.subr.mxu0 0.0
    %167 = vmatpush1.msra.mxu0 0.0
    %168 = vmatprep.subr.mxu0 0.0
    %169 = vmatpush1.msra.mxu0 0.0
    %170 = vmatprep.subr.mxu0 0.0
    %171 = vmatpush1.msra.mxu0 0.0
    %172 = vmatprep.subr.mxu0 0.0
    %173 = vmatpush1.msra.mxu0 0.0
    %174 = vmatprep.subr.mxu0 0.0
    %175 = vmatpush1.msra.mxu0 0.0
    %176 = vmatprep.subr.mxu0 0.0
    %177 = vmatpush1.msra.mxu0 0.0
    %178 = vmatprep.subr.mxu0 0.0
    %179 = vmatpush1.msra.mxu0 0.0
    %180 = vmatprep.subr.mxu0 0.0
    %181 = vmatpush1.msra.mxu0 0.0
    %182 = vmatprep.subr.mxu0 0.0
    %183 = vmatpush1.msra.mxu0 0.0
    %184 = vmatprep.subr.mxu0 0.0
    %185 = vmatpush1.msra.mxu0 0.0
    %186 = vmatprep.subr.mxu0 0.0
    %187 = vmatpush1.msra.mxu0 0.0
    %188 = vmatprep.subr.mxu0 0.0
    %189 = vmatpush1.msra.mxu0 0.0
    %190 = vmatprep.subr.mxu0 0.0
    %191 = vmatpush1.msra.mxu0 0.0
    %192 = vmatprep.subr.mxu0 0.0
    %193 = vmatpush1.msra.mxu0 0.0
    %194 = vmatprep.subr.mxu0 0.0
    %195 = vmatpush1.msra.mxu0 0.0
    %196 = vmatprep.subr.mxu0 0.0
    %197 = vmatpush1.msra.mxu0 0.0
    %198 = vmatprep.mubr.f32.mxu0 0.0
    %199 = vmatmul.mubr.f32.gmra.mrb[0].mxu0 %v123
    %v200 = vpop.f32.mrb[0].mxu0
    %v201 = vadd.f32 0.0, %v200
    %v202 = vpop.f32.mrb[0].mxu0
    %203 = vmatprep.mubr.f32.mxu0 0.0
    %204 = vmatmul.mubr.f32.gmra.mrb[0].mxu0 %v126
    %v205 = vpop.f32.mrb[0].mxu0
    %v206 = vadd.f32 0.0, %v205
    %v207 = vpop.f32.mrb[0].mxu0
    %208 = vmatprep.mubr.f32.mxu0 0.0
    %209 = vmatmul.mubr.f32.gmra.mrb[0].mxu0 %v129
    %v210 = vpop.f32.mrb[0].mxu0
    %v211 = vadd.f32 0.0, %v210
    %v212 = vpop.f32.mrb[0].mxu0
    %213 = vmatprep.mubr.f32.mxu0 0.0
    %214 = vmatmul.mubr.f32.gmra.mrb[0].mxu0 %v132
    %v215 = vpop.f32.mrb[0].mxu0
    %v216 = vadd.f32 0.0, %v215
    %v217 = vpop.f32.mrb[0].mxu0
    %218 = vdwg.mxu0
    %v219 = vadd.f32 %v85, %v201
    %v220 = vadd.f32 %v86, %v206
    %v221 = vadd.f32 %v87, %v211
    %v222 = vadd.f32 %v88, %v216
    %223 = vst.msk [vmem:[#allocation3] sm:$0xff] %vm72, %v219
    %224 = vst.msk [vmem:[#allocation3 + $0x8] sm:$0xff] %vm72, %v220
    %225 = vst.msk [vmem:[#allocation3 + $0x10] sm:$0xff] %vm72, %v221
    %226 = vst.msk [vmem:[#allocation3 + $0x18] sm:$0xff] %vm72, %v222
    // Predicated region
    $region30: #{tpu_custom_call.1} parent=1 // pred_check
      %p227 = pneg %p58
    $region31: #{tpu_custom_call.1} parent=1 // pred_check_branch
      %229 = sbr.rel (%p227) target = $region33
    $region32: #{tpu_custom_call.1} parent=1 // pred_region
      %v230 = vld [vmem:[#allocation3] sm:$0xff]
      %v231 = vld [vmem:[#allocation3 + $0x8] sm:$0xff]
      %v232 = vld [vmem:[#allocation3 + $0x10] sm:$0xff]
      %v233 = vld [vmem:[#allocation3 + $0x18] sm:$0xff]
      %v234 = vld [vmem:[#allocation2] sm:$0x1]
      %v235 = vmul.f32 %v234, 0.0625
      %v236 = vlaneseq
      %v237 = vshrl.u32 %v236, 7
      %v238 = vadd.s32 %v237, 8
      %v239 = vadd.s32 %v237, 16
      %v240 = vadd.s32 %v237, 24
      %v241 = vlaneseq
      %v242 = vand.u32 %v241, 127
      %vm243 = vcmp.eq.s32.totalorder %v237, %v242
      %vm244 = vcmp.eq.s32.totalorder %v238, %v242
      %vm245 = vcmp.eq.s32.totalorder %v239, %v242
      %vm246 = vcmp.eq.s32.totalorder %v240, %v242
      %v247 = vsel %vm243, %v230, 0.0
      %v248 = vsel %vm244, %v231, 0.0
      %v249 = vsel %vm245, %v232, 0.0
      %v250 = vsel %vm246, %v233, 0.0
      %v251 = vsel %vm72, %v247, 0.0
      %v252 = vsel %vm72, %v248, 0.0
      %v253 = vadd.f32 %v251, %v252
      %v254 = vsel %vm72, %v249, 0.0
      %v255 = vadd.f32 %v253, %v254
      %v256 = vsel %vm72, %v250, 0.0
      %v257 = vadd.f32 %v255, %v256
      %v258 = vrot.slane %v257, 4
      %v259 = vadd.f32 %v257, %v258
      %v260 = vrot.slane %v259, 2
      %v261 = vadd.f32 %v259, %v260
      %v262 = vrot.slane %v261, 1
      %v263 = vadd.f32 %v261, %v262
      %v264 = vmul.f32 %v263, 0.0625
      %v265 = vmul.f32 %v235, %v235
      %v266 = vsub.f32 %v264, %v265
      %v267 = vmax.f32 %v266, 0.0
      %v268 = vrsqrt.pop %v267
      %v269 = vmul.f32 %v267, %v268
      %vm270 = vcmp.eq.f32.partialorder %v267, inf
      %v271 = vsel %vm270, %v267, %v269
      %vm272 = vcmp.eq.f32.partialorder %v267, 0.0
      %v273 = vand.u32 %v267, 2147483648
      %v274 = vsel %vm272, %v273, %v271
      %275 = vxpose.xlu0.b32.start [1/16] %v235, 128
      %276 = vxpose.xlu0.b32.cont [2/16] 0.0, 128
      %277 = vxpose.xlu0.b32.cont [3/16] 0.0, 128
      %278 = vxpose.xlu0.b32.cont [4/16] 0.0, 128
      %279 = vxpose.xlu0.b32.cont [5/16] 0.0, 128
      %280 = vxpose.xlu0.b32.cont [6/16] 0.0, 128
      %281 = vxpose.xlu0.b32.cont [7/16] 0.0, 128
      %282 = vxpose.xlu0.b32.cont [8/16] 0.0, 128
      %283 = vxpose.xlu0.b32.cont [9/16] 0.0, 128
      %284 = vxpose.xlu0.b32.cont [10/16] 0.0, 128
      %285 = vxpose.xlu0.b32.cont [11/16] 0.0, 128
      %286 = vxpose.xlu0.b32.cont [12/16] 0.0, 128
      %287 = vxpose.xlu0.b32.cont [13/16] 0.0, 128
      %288 = vxpose.xlu0.b32.cont [14/16] 0.0, 128
      %289 = vxpose.xlu0.b32.cont [15/16] 0.0, 128
      %290 = vxpose.xlu0.b32.end [16/16] 0.0, 128
      %v291 = vpop.trf.xlu0
      %v292 = vpop.trf.xlu0
      %v293 = vpop.trf.xlu0
      %v294 = vpop.trf.xlu0
      %v295 = vpop.trf.xlu0
      %v296 = vpop.trf.xlu0
      %v297 = vpop.trf.xlu0
      %v298 = vpop.trf.xlu0
      %v299 = vpop.trf.xlu0
      %v300 = vpop.trf.xlu0
      %v301 = vpop.trf.xlu0
      %v302 = vpop.trf.xlu0
      %v303 = vpop.trf.xlu0
      %v304 = vpop.trf.xlu0
      %v305 = vpop.trf.xlu0
      %v306 = vpop.trf.xlu0
      %vm307 = vcmask 7168
      %v309 = vsel %vm307, %v291, 0
      %v312 = vsel %vm307, %v292, 0
      %v315 = vsel %vm307, %v293, 0
      %v318 = vsel %vm307, %v294, 0
      %vm320 = vcmask 1040384
      %v322 = vsel %vm320, %v235, 0
      %324 = vmatprep.subr.mxu0 0.0
      %325 = vmatpush1.msra.mxu0 %v322
      %326 = vmatprep.subr.mxu0 0.0
      %327 = vmatpush1.msra.mxu0 0.0
      %328 = vmatprep.subr.mxu0 0.0
      %329 = vmatpush1.msra.mxu0 0.0
      %330 = vmatprep.subr.mxu0 0.0
      %331 = vmatpush1.msra.mxu0 0.0
      %332 = vmatprep.subr.mxu0 0.0
      %333 = vmatpush1.msra.mxu0 0.0
      %334 = vmatprep.subr.mxu0 0.0
      %335 = vmatpush1.msra.mxu0 0.0
      %336 = vmatprep.subr.mxu0 0.0
      %337 = vmatpush1.msra.mxu0 0.0
      %338 = vmatprep.subr.mxu0 0.0
      %339 = vmatpush1.msra.mxu0 0.0
      %340 = vmatprep.subr.mxu0 0.0
      %341 = vmatpush1.msra.mxu0 0.0
      %342 = vmatprep.subr.mxu0 0.0
      %343 = vmatpush1.msra.mxu0 0.0
      %344 = vmatprep.subr.mxu0 0.0
      %345 = vmatpush1.msra.mxu0 0.0
      %346 = vmatprep.subr.mxu0 0.0
      %347 = vmatpush1.msra.mxu0 0.0
      %348 = vmatprep.subr.mxu0 0.0
      %349 = vmatpush1.msra.mxu0 0.0
      %350 = vmatprep.subr.mxu0 0.0
      %351 = vmatpush1.msra.mxu0 0.0
      %352 = vmatprep.subr.mxu0 0.0
      %353 = vmatpush1.msra.mxu0 0.0
      %354 = vmatprep.subr.mxu0 0.0
      %355 = vmatpush1.msra.mxu0 0.0
      %356 = vmatprep.subr.mxu0 0.0
      %357 = vmatpush1.msra.mxu0 0.0
      %358 = vmatprep.subr.mxu0 0.0
      %359 = vmatpush1.msra.mxu0 0.0
      %360 = vmatprep.subr.mxu0 0.0
      %361 = vmatpush1.msra.mxu0 0.0
      %362 = vmatprep.subr.mxu0 0.0
      %363 = vmatpush1.msra.mxu0 0.0
      %364 = vmatprep.subr.mxu0 0.0
      %365 = vmatpush1.msra.mxu0 0.0
      %366 = vmatprep.subr.mxu0 0.0
      %367 = vmatpush1.msra.mxu0 0.0
      %368 = vmatprep.subr.mxu0 0.0
      %369 = vmatpush1.msra.mxu0 0.0
      %370 = vmatprep.subr.mxu0 0.0
      %371 = vmatpush1.msra.mxu0 0.0
      %372 = vmatprep.subr.mxu0 0.0
      %373 = vmatpush1.msra.mxu0 0.0
      %374 = vmatprep.subr.mxu0 0.0
      %375 = vmatpush1.msra.mxu0 0.0
      %376 = vmatprep.subr.mxu0 0.0
      %377 = vmatpush1.msra.mxu0 0.0
      %378 = vmatprep.subr.mxu0 0.0
      %379 = vmatpush1.msra.mxu0 0.0
      %380 = vmatprep.subr.mxu0 0.0
      %381 = vmatpush1.msra.mxu0 0.0
      %382 = vmatprep.subr.mxu0 0.0
      %383 = vmatpush1.msra.mxu0 0.0
      %384 = vmatprep.subr.mxu0 0.0
      %385 = vmatpush1.msra.mxu0 0.0
      %386 = vmatprep.subr.mxu0 0.0
      %387 = vmatpush1.msra.mxu0 0.0
      %388 = vmatprep.mubr.f32.mxu0 0.0
      %389 = vmatmul.mubr.f32.gmra.mrb[0].mxu0 %v309
      %v390 = vpop.f32.mrb[0].mxu0
      %v391 = vadd.f32 0.0, %v390
      %v392 = vpop.f32.mrb[0].mxu0
      %393 = vmatprep.mubr.f32.mxu0 0.0
      %394 = vmatmul.mubr.f32.gmra.mrb[0].mxu0 %v312
      %v395 = vpop.f32.mrb[0].mxu0
      %v396 = vadd.f32 0.0, %v395
      %v397 = vpop.f32.mrb[0].mxu0
      %398 = vmatprep.mubr.f32.mxu0 0.0
      %399 = vmatmul.mubr.f32.gmra.mrb[0].mxu0 %v315
      %v400 = vpop.f32.mrb[0].mxu0
      %v401 = vadd.f32 0.0, %v400
      %v402 = vpop.f32.mrb[0].mxu0
      %403 = vmatprep.mubr.f32.mxu0 0.0
      %404 = vmatmul.mubr.f32.gmra.mrb[0].mxu0 %v318
      %v405 = vpop.f32.mrb[0].mxu0
      %v406 = vadd.f32 0.0, %v405
      %v407 = vpop.f32.mrb[0].mxu0
      %408 = vdwg.mxu0
      %v409 = vmul.f32 %v230, 0.0625
      %v410 = vmul.f32 %v231, 0.0625
      %v411 = vmul.f32 %v232, 0.0625
      %v412 = vmul.f32 %v233, 0.0625
      %v413 = vsub.f32 %v409, %v391
      %v414 = vsub.f32 %v410, %v396
      %v415 = vsub.f32 %v411, %v401
      %v416 = vsub.f32 %v412, %v406
      %v417 = vld [vmem:[#allocation7] sm:$0xff]
      %v418 = vld [vmem:[#allocation7 + $0x8] sm:$0xff]
      %v419 = vld [vmem:[#allocation7 + $0x10] sm:$0xff]
      %v420 = vld [vmem:[#allocation7 + $0x18] sm:$0xff]
      %v421 = vsub.f32 %v413, %v417
      %v422 = vsub.f32 %v414, %v418
      %v423 = vsub.f32 %v415, %v419
      %v424 = vsub.f32 %v416, %v420
      %v425 = vmul.f32 %v421, 0.05
      %v426 = vmul.f32 %v422, 0.05
      %v427 = vmul.f32 %v423, 0.05
      %v428 = vmul.f32 %v424, 0.05
      %v429 = vadd.f32 %v417, %v425
      %v430 = vadd.f32 %v418, %v426
      %v431 = vadd.f32 %v419, %v427
      %v432 = vadd.f32 %v420, %v428
      %v433 = vld [vmem:[#allocation9] sm:$0x1]
      %v434 = vsub.f32 %v274, %v433
      %v435 = vmul.f32 %v434, 0.05
      %v436 = vadd.f32 %v433, %v435
      %437 = vst.msk [vmem:[#allocation10] sm:$0xff] %vm72, %v429
      %438 = vst.msk [vmem:[#allocation10 + $0x8] sm:$0xff] %vm72, %v430
      %439 = vst.msk [vmem:[#allocation10 + $0x10] sm:$0xff] %vm72, %v431
      %440 = vst.msk [vmem:[#allocation10 + $0x18] sm:$0xff] %vm72, %v432
      %441 = vst.msk [vmem:[#allocation11] sm:$0x1] %vm83, %v436
      %v442 = vsel %vm243, %v429, 0.0
      %v443 = vsel %vm244, %v430, 0.0
      %v444 = vsel %vm245, %v431, 0.0
      %v445 = vsel %vm246, %v432, 0.0
      %v446 = vsel %vm72, %v442, 0.0
      %v447 = vsel %vm72, %v443, 0.0
      %v448 = vadd.f32 %v446, %v447
      %v449 = vsel %vm72, %v444, 0.0
      %v450 = vadd.f32 %v448, %v449
      %v451 = vsel %vm72, %v445, 0.0
      %v452 = vadd.f32 %v450, %v451
      %v453 = vrot.slane %v452, 4
      %v454 = vadd.f32 %v452, %v453
      %v455 = vrot.slane %v454, 2
      %v456 = vadd.f32 %v454, %v455
      %v457 = vrot.slane %v456, 1
      %v458 = vadd.f32 %v456, %v457
      %459 = vxpose.xlu0.b32.start [1/16] %v436, 128
      %460 = vxpose.xlu0.b32.cont [2/16] 0.0, 128
      %461 = vxpose.xlu0.b32.cont [3/16] 0.0, 128
      %462 = vxpose.xlu0.b32.cont [4/16] 0.0, 128
      %463 = vxpose.xlu0.b32.cont [5/16] 0.0, 128
      %464 = vxpose.xlu0.b32.cont [6/16] 0.0, 128
      %465 = vxpose.xlu0.b32.cont [7/16] 0.0, 128
      %466 = vxpose.xlu0.b32.cont [8/16] 0.0, 128
      %467 = vxpose.xlu0.b32.cont [9/16] 0.0, 128
      %468 = vxpose.xlu0.b32.cont [10/16] 0.0, 128
      %469 = vxpose.xlu0.b32.cont [11/16] 0.0, 128
      %470 = vxpose.xlu0.b32.cont [12/16] 0.0, 128
      %471 = vxpose.xlu0.b32.cont [13/16] 0.0, 128
      %472 = vxpose.xlu0.b32.cont [14/16] 0.0, 128
      %473 = vxpose.xlu0.b32.cont [15/16] 0.0, 128
      %474 = vxpose.xlu0.b32.end [16/16] 0.0, 128
      %v475 = vpop.trf.xlu0
      %v476 = vpop.trf.xlu0
      %v477 = vpop.trf.xlu0
      %v478 = vpop.trf.xlu0
      %v479 = vpop.trf.xlu0
      %v480 = vpop.trf.xlu0
      %v481 = vpop.trf.xlu0
      %v482 = vpop.trf.xlu0
      %v483 = vpop.trf.xlu0
      %v484 = vpop.trf.xlu0
      %v485 = vpop.trf.xlu0
      %v486 = vpop.trf.xlu0
      %v487 = vpop.trf.xlu0
      %v488 = vpop.trf.xlu0
      %v489 = vpop.trf.xlu0
      %v490 = vpop.trf.xlu0
      %v492 = vsel %vm307, %v475, 0
      %v495 = vsel %vm307, %v476, 0
      %v498 = vsel %vm307, %v477, 0
      %v501 = vsel %vm307, %v478, 0
      %v504 = vsel %vm320, %v436, 0
      %506 = vmatprep.subr.mxu0 0.0
      %507 = vmatpush1.msra.mxu0 %v504
      %508 = vmatprep.subr.mxu0 0.0
      %509 = vmatpush1.msra.mxu0 0.0
      %510 = vmatprep.subr.mxu0 0.0
      %511 = vmatpush1.msra.mxu0 0.0
      %512 = vmatprep.subr.mxu0 0.0
      %513 = vmatpush1.msra.mxu0 0.0
      %514 = vmatprep.subr.mxu0 0.0
      %515 = vmatpush1.msra.mxu0 0.0
      %516 = vmatprep.subr.mxu0 0.0
      %517 = vmatpush1.msra.mxu0 0.0
      %518 = vmatprep.subr.mxu0 0.0
      %519 = vmatpush1.msra.mxu0 0.0
      %520 = vmatprep.subr.mxu0 0.0
      %521 = vmatpush1.msra.mxu0 0.0
      %522 = vmatprep.subr.mxu0 0.0
      %523 = vmatpush1.msra.mxu0 0.0
      %524 = vmatprep.subr.mxu0 0.0
      %525 = vmatpush1.msra.mxu0 0.0
      %526 = vmatprep.subr.mxu0 0.0
      %527 = vmatpush1.msra.mxu0 0.0
      %528 = vmatprep.subr.mxu0 0.0
      %529 = vmatpush1.msra.mxu0 0.0
      %530 = vmatprep.subr.mxu0 0.0
      %531 = vmatpush1.msra.mxu0 0.0
      %532 = vmatprep.subr.mxu0 0.0
      %533 = vmatpush1.msra.mxu0 0.0
      %534 = vmatprep.subr.mxu0 0.0
      %535 = vmatpush1.msra.mxu0 0.0
      %536 = vmatprep.subr.mxu0 0.0
      %537 = vmatpush1.msra.mxu0 0.0
      %538 = vmatprep.subr.mxu0 0.0
      %539 = vmatpush1.msra.mxu0 0.0
      %540 = vmatprep.subr.mxu0 0.0
      %541 = vmatpush1.msra.mxu0 0.0
      %542 = vmatprep.subr.mxu0 0.0
      %543 = vmatpush1.msra.mxu0 0.0
      %544 = vmatprep.subr.mxu0 0.0
      %545 = vmatpush1.msra.mxu0 0.0
      %546 = vmatprep.subr.mxu0 0.0
      %547 = vmatpush1.msra.mxu0 0.0
      %548 = vmatprep.subr.mxu0 0.0
      %549 = vmatpush1.msra.mxu0 0.0
      %550 = vmatprep.subr.mxu0 0.0
      %551 = vmatpush1.msra.mxu0 0.0
      %552 = vmatprep.subr.mxu0 0.0
      %553 = vmatpush1.msra.mxu0 0.0
      %554 = vmatprep.subr.mxu0 0.0
      %555 = vmatpush1.msra.mxu0 0.0
      %556 = vmatprep.subr.mxu0 0.0
      %557 = vmatpush1.msra.mxu0 0.0
      %558 = vmatprep.subr.mxu0 0.0
      %559 = vmatpush1.msra.mxu0 0.0
      %560 = vmatprep.subr.mxu0 0.0
      %561 = vmatpush1.msra.mxu0 0.0
      %562 = vmatprep.subr.mxu0 0.0
      %563 = vmatpush1.msra.mxu0 0.0
      %564 = vmatprep.subr.mxu0 0.0
      %565 = vmatpush1.msra.mxu0 0.0
      %566 = vmatprep.subr.mxu0 0.0
      %567 = vmatpush1.msra.mxu0 0.0
      %568 = vmatprep.subr.mxu0 0.0
      %569 = vmatpush1.msra.mxu0 0.0
      %570 = vmatprep.mubr.f32.mxu0 0.0
      %571 = vmatmul.mubr.f32.gmra.mrb[0].mxu0 %v492
      %v572 = vpop.f32.mrb[0].mxu0
      %v573 = vadd.f32 1e-06, %v572
      %v574 = vpop.f32.mrb[0].mxu0
      %575 = vmatprep.mubr.f32.mxu0 0.0
      %576 = vmatmul.mubr.f32.gmra.mrb[0].mxu0 %v495
      %v577 = vpop.f32.mrb[0].mxu0
      %v578 = vadd.f32 1e-06, %v577
      %v579 = vpop.f32.mrb[0].mxu0
      %580 = vmatprep.mubr.f32.mxu0 0.0
      %581 = vmatmul.mubr.f32.gmra.mrb[0].mxu0 %v498
      %v582 = vpop.f32.mrb[0].mxu0
      %v583 = vadd.f32 1e-06, %v582
      %v584 = vpop.f32.mrb[0].mxu0
      %585 = vmatprep.mubr.f32.mxu0 0.0
      %586 = vmatmul.mubr.f32.gmra.mrb[0].mxu0 %v501
      %v587 = vpop.f32.mrb[0].mxu0
      %v588 = vadd.f32 1e-06, %v587
      %v589 = vpop.f32.mrb[0].mxu0
      %590 = vdwg.mxu0
      %v591 = vrcp.pop %v573
      %v592 = vmul.f32 %v429, %v591
      %v593 = vrcp.pop %v578
      %v594 = vmul.f32 %v430, %v593
      %v595 = vrcp.pop %v583
      %v596 = vmul.f32 %v431, %v595
      %v597 = vrcp.pop %v588
      %v598 = vmul.f32 %v432, %v597
      %v599 = vmax.f32 %v592, -1.0
      %v600 = vmax.f32 %v594, -1.0
      %v601 = vmax.f32 %v596, -1.0
      %v602 = vmax.f32 %v598, -1.0
      %v603 = vmin.f32 %v599, 1.0
      %v604 = vmin.f32 %v600, 1.0
      %v605 = vmin.f32 %v601, 1.0
      %v606 = vmin.f32 %v602, 1.0
      %v607 = vmul.f32 %v603, %v603
      %v608 = vmul.f32 %v604, %v604
      %v609 = vmul.f32 %v605, %v605
      %v610 = vmul.f32 %v606, %v606
      %v612 = vsel %vm72, 0.03125, 0
      %614 = vmatprep.subr.mxu0 0.0
      %615 = vmatpush1.msra.mxu0 %v607
      %616 = vmatprep.subr.mxu0 0.0
      %617 = vmatpush1.msra.mxu0 %v608
      %618 = vmatprep.subr.mxu0 0.0
      %619 = vmatpush1.msra.mxu0 %v609
      %620 = vmatprep.subr.mxu0 0.0
      %621 = vmatpush1.msra.mxu0 %v610
      %622 = vmatprep.subr.mxu0 0.0
      %623 = vmatpush1.msra.mxu0 0.0
      %624 = vmatprep.subr.mxu0 0.0
      %625 = vmatpush1.msra.mxu0 0.0
      %626 = vmatprep.subr.mxu0 0.0
      %627 = vmatpush1.msra.mxu0 0.0
      %628 = vmatprep.subr.mxu0 0.0
      %629 = vmatpush1.msra.mxu0 0.0
      %630 = vmatprep.subr.mxu0 0.0
      %631 = vmatpush1.msra.mxu0 0.0
      %632 = vmatprep.subr.mxu0 0.0
      %633 = vmatpush1.msra.mxu0 0.0
      %634 = vmatprep.subr.mxu0 0.0
      %635 = vmatpush1.msra.mxu0 0.0
      %636 = vmatprep.subr.mxu0 0.0
      %637 = vmatpush1.msra.mxu0 0.0
      %638 = vmatprep.subr.mxu0 0.0
      %639 = vmatpush1.msra.mxu0 0.0
      %640 = vmatprep.subr.mxu0 0.0
      %641 = vmatpush1.msra.mxu0 0.0
      %642 = vmatprep.subr.mxu0 0.0
      %643 = vmatpush1.msra.mxu0 0.0
      %644 = vmatprep.subr.mxu0 0.0
      %645 = vmatpush1.msra.mxu0 0.0
      %646 = vmatprep.subr.mxu0 0.0
      %647 = vmatpush1.msra.mxu0 0.0
      %648 = vmatprep.subr.mxu0 0.0
      %649 = vmatpush1.msra.mxu0 0.0
      %650 = vmatprep.subr.mxu0 0.0
      %651 = vmatpush1.msra.mxu0 0.0
      %652 = vmatprep.subr.mxu0 0.0
      %653 = vmatpush1.msra.mxu0 0.0
      %654 = vmatprep.subr.mxu0 0.0
      %655 = vmatpush1.msra.mxu0 0.0
      %656 = vmatprep.subr.mxu0 0.0
      %657 = vmatpush1.msra.mxu0 0.0
      %658 = vmatprep.subr.mxu0 0.0
      %659 = vmatpush1.msra.mxu0 0.0
      %660 = vmatprep.subr.mxu0 0.0
      %661 = vmatpush1.msra.mxu0 0.0
      %662 = vmatprep.subr.mxu0 0.0
      %663 = vmatpush1.msra.mxu0 0.0
      %664 = vmatprep.subr.mxu0 0.0
      %665 = vmatpush1.msra.mxu0 0.0
      %666 = vmatprep.subr.mxu0 0.0
      %667 = vmatpush1.msra.mxu0 0.0
      %668 = vmatprep.subr.mxu0 0.0
      %669 = vmatpush1.msra.mxu0 0.0
      %670 = vmatprep.subr.mxu0 0.0
      %671 = vmatpush1.msra.mxu0 0.0
      %672 = vmatprep.subr.mxu0 0.0
      %673 = vmatpush1.msra.mxu0 0.0
      %674 = vmatprep.subr.mxu0 0.0
      %675 = vmatpush1.msra.mxu0 0.0
      %676 = vmatprep.subr.mxu0 0.0
      %677 = vmatpush1.msra.mxu0 0.0
      %678 = vmatprep.mubr.f32.mxu0 0.0
      %679 = vmatmul.mubr.f32.gmra.mrb[0].mxu0 %v612
      %v680 = vpop.f32.mrb[0].mxu0
      %v681 = vadd.f32 0.0, %v680
      %v682 = vpop.f32.mrb[0].mxu0
      %683 = vdwg.mxu0
      %v684 = vmul.f32 %v681, %v436
      %v685 = vadd.f32 %v684, 0.001
      %v686 = vrsqrt.pop %v685
      %v687 = vsel %vm72, %v458, 0.0
      %688 = vadd.xlane.f32.xlu0 %v687
      %v689 = vpop.xlane.xlu0 %688
      %v690 = vmul.f32 %v458, %v686
      %v691 = vmul.f32 %v690, %v686
      %v692 = vsel %vm83, %v691, 0.0
      %693 = vadd.xlane.f32.xlu0 %v692
      %v694 = vpop.xlane.xlu0 %693
      %v695 = vadd.f32 %v694, 0.001
      %v696 = vrcp.pop %v695
      %v697 = vmul.f32 %v689, %v696
      %v698 = vrsqrt.pop %v697
      %v699 = vmul.f32 %v697, %v698
      %vm700 = vcmp.eq.f32.partialorder %v697, inf
      %v701 = vsel %vm700, %v697, %v699
      %vm702 = vcmp.eq.f32.partialorder %v697, 0.0
      %v703 = vand.u32 %v697, 2147483648
      %v704 = vsel %vm702, %v703, %v701
      %v705 = vmul.f32 %v686, %v704
      %706 = vst.msk [vmem:[#allocation13] sm:$0x1] %vm83, %v705
    $region33: #{tpu_custom_call.1} parent=1 // pred_fallthru
      _
    // Predicated region
    $region34: #{tpu_custom_call.1} parent=1 // pred_check
      _
    $region35: #{tpu_custom_call.1} parent=1 // pred_check_branch
      %708 = sbr.rel (0) target = $region37
    $region36: #{tpu_custom_call.1} parent=1 // pred_region
      %s710 = ssub.s32 512, 512
      %711 = vsyncadd [#allocation6], %s710
      %s712 = sshll.u32 [#allocation10], 4
      %s713 = int_to_ptr.vmem [resolvable:$true] %s712
      %718 = dma.vmem_to_hbm [thread:$0]  %s713, 512, %s3, [#allocation6], 128, 128, 8
    $region37: #{tpu_custom_call.1} parent=1 // pred_fallthru
      _
    // Predicated region
    $region38: #{tpu_custom_call.1} parent=1 // pred_check
      _
    $region39: #{tpu_custom_call.1} parent=1 // pred_check_branch
      %720 = sbr.rel (0) target = $region41
    $region40: #{tpu_custom_call.1} parent=1 // pred_region
      %s722 = ssub.s32 16, 16
      %723 = vsyncadd [#allocation12], %s722
      %s725 = sshll.u32 [#allocation11], 4
      %s726 = int_to_ptr.vmem [resolvable:$true] %s725
      %728 = dma.vmem_to_hbm [thread:$0]  %s726, 16, %s4, [#allocation12]
    $region41: #{tpu_custom_call.1} parent=1 // pred_fallthru
      _
    // Predicated region
    $region42: #{tpu_custom_call.1} parent=1 // pred_check
      _
    $region43: #{tpu_custom_call.1} parent=1 // pred_check_branch
      %730 = sbr.rel (0) target = $region45
    $region44: #{tpu_custom_call.1} parent=1 // pred_region
      %s732 = ssub.s32 16, 16
      %733 = vsyncadd [#allocation12], %s732
      %s735 = sshll.u32 [#allocation13], 4
      %s736 = int_to_ptr.vmem [resolvable:$true] %s735
      %738 = dma.vmem_to_hbm [thread:$0]  %s736, 16, %s5, [#allocation12]
    $region45: #{tpu_custom_call.1} parent=1 // pred_fallthru
      _
    // Predicated region
    $region46: #{tpu_custom_call.1} parent=1 // pred_check
      _
    $region47: #{tpu_custom_call.1} parent=1 // pred_check_branch
      %740 = sbr.rel (0) target = $region49
    $region48: #{tpu_custom_call.1} parent=1 // pred_region
      %741 = dma.done [#allocation6], 512
    $region49: #{tpu_custom_call.1} parent=1 // pred_fallthru
      _
    // Predicated region
    $region50: #{tpu_custom_call.1} parent=1 // pred_check
      _
    $region51: #{tpu_custom_call.1} parent=1 // pred_check_branch
      %743 = sbr.rel (0) target = $region53
    $region52: #{tpu_custom_call.1} parent=1 // pred_region
      %744 = dma.done [#allocation12], 16
    $region53: #{tpu_custom_call.1} parent=1 // pred_fallthru
      _
    // Predicated region
    $region54: #{tpu_custom_call.1} parent=1 // pred_check
      _
    $region55: #{tpu_custom_call.1} parent=1 // pred_check_branch
      %746 = sbr.rel (0) target = $region57
    $region56: #{tpu_custom_call.1} parent=1 // pred_region
      %747 = dma.done [#allocation12], 16
    $region57: #{tpu_custom_call.1} parent=1 // pred_fallthru
      _
    %748 = vsyncpa [#allocation5], 1
    %749 = vsyncpa [#allocation8], 1
    %750 = vsyncpa [#allocation6], 1
    %751 = vsyncpa [#allocation12], 1

</llo_original>
